<compile_context>
chip_gen: v6e
topology: v6e:2x2x1
jax: 0.10.0
libtpu: 0.0.40
codegen_flags: <defaults>
</compile_context>

<pallas_src>
import jax
import jax.numpy as jnp
from jax.experimental import pallas as pl
from jax.experimental.pallas import tpu as pltpu


def _matmul_bias_kernel(w_ref, b_ref, x_ref, o_ref):
    # w_ref: (Cout, Cin), b_ref: (Cout, 1), x_ref: (Cin, TM), o_ref: (Cout, TM)
    y = jnp.dot(w_ref[...], x_ref[...], preferred_element_type=jnp.float32)
    o_ref[...] = (y + b_ref[...]).astype(o_ref.dtype)


def _pick_tile(M, N, tile_cap=16384):
    """Pixel tile: multiple of 128, as large as possible up to tile_cap,
    split in two when the whole problem would otherwise be a single grid step
    on a single-batch input (gives the megacore >= 2 parallel steps)."""
    tile = min(tile_cap, max(128, (M // 128) * 128))
    if N == 1 and tile >= 256 and pl.cdiv(M, tile) == 1:
        tile = max(128, ((tile // 2) // 128) * 128)
    return tile


def _conv1x1_lane_dense(x_ncm, w_mat, b_col, *, tile_cap=16384):
    """Y[n] = W @ X[n] + b with the pixel axis on the lanes, tiled over M.

    x_ncm: (N, Cin, M) float32  ->  (N, Cout, M) float32
    """
    N, Cin, M = x_ncm.shape
    Cout = w_mat.shape[0]

    tile = _pick_tile(M, N, tile_cap)
    n_tiles = pl.cdiv(M, tile)

    flops = 2 * N * M * Cout * Cin
    bytes_accessed = 4 * (N * Cin * M + N * Cout * M + Cout * Cin + Cout)

    return pl.pallas_call(
        _matmul_bias_kernel,
        out_shape=jax.ShapeDtypeStruct((N, Cout, M), jnp.float32),
        grid=(N, n_tiles),
        in_specs=[
            pl.BlockSpec((Cout, Cin), lambda n, i: (0, 0)),          # weight, resident
            pl.BlockSpec((Cout, 1), lambda n, i: (0, 0)),            # bias, resident
            pl.BlockSpec((pl.Squeezed(), Cin, tile),
                         lambda n, i: (n, 0, i)),                    # pixel tile
        ],
        out_specs=pl.BlockSpec((pl.Squeezed(), Cout, tile),
                               lambda n, i: (n, 0, i)),
        compiler_params=pltpu.CompilerParams(
            dimension_semantics=("parallel", "parallel"),
            vmem_limit_bytes=32 * 1024 * 1024,
        ),
        cost_estimate=pl.CostEstimate(
            flops=flops, transcendentals=0, bytes_accessed=bytes_accessed),
    )(w_mat, b_col, x_ncm)


def model_forward(x, params):
    N, Cin, H, W = x.shape
    Cout = params["w2"].shape[0]
    w1 = params["w1"].reshape(Cout, Cin).astype(jnp.float32)   # (3, 32)
    b1 = params["b1"].astype(jnp.float32)                      # (3,)
    w2 = params["w2"].reshape(Cout, Cout).astype(jnp.float32)  # (3, 3)
    b2 = params["b2"].astype(jnp.float32)                      # (3,)

    # exact algebraic fusion of v3 = conv2(conv1(x)) - 0.78 on interior pixels
    w_eff = w2 @ w1                         # (3, 32)
    b_eff = w2 @ b1 + b2 - 0.78             # interior + inner-ring value
    outer_val = b2 - 0.78                   # conv2's own zero-pad ring

    # native NCHW-flattened view (N, Cin, H*W) -- pure reshape, no transpose
    M = H * W
    x_flat = x.astype(jnp.float32).reshape(N, Cin, M)

    y = _conv1x1_lane_dense(x_flat, w_eff, b_eff.reshape(Cout, 1))  # (N, Cout, M)
    y_img = y.reshape(N, Cout, H, W)

    # single fused pass to assemble the padded canvas (interior | inner | outer)
    Hp, Wp = H + 4, W + 4
    y_pad = jnp.pad(y_img, ((0, 0), (0, 0), (2, 2), (2, 2)))
    r = jnp.arange(Hp).reshape(1, 1, Hp, 1)
    c = jnp.arange(Wp).reshape(1, 1, 1, Wp)
    interior = (r >= 2) & (r < H + 2) & (c >= 2) & (c < W + 2)
    outer = (r == 0) | (r == Hp - 1) | (c == 0) | (c == Wp - 1)
    ring = jnp.where(outer,
                     outer_val.reshape(1, Cout, 1, 1),
                     b_eff.reshape(1, Cout, 1, 1))
    return jnp.where(interior, y_pad, ring)


def _ref_forward(x, params):
    """Pure-JAX reference: two explicit padded 1x1 convs, then -0.78."""
    w1 = params["w1"].reshape(3, -1)
    b1 = params["b1"]
    w2 = params["w2"].reshape(3, 3)
    b2 = params["b2"]
    xp = jnp.pad(x, ((0, 0), (0, 0), (1, 1), (1, 1)))
    v1 = jnp.einsum("oc,nchw->nohw", w1, xp) + b1.reshape(1, -1, 1, 1)
    v1p = jnp.pad(v1, ((0, 0), (0, 0), (1, 1), (1, 1)))
    v2 = jnp.einsum("oc,nchw->nohw", w2, v1p) + b2.reshape(1, -1, 1, 1)
    return v2 - 0.78


def init_params(key):
    k1, k2, k3, k4 = jax.random.split(key, 4)
    # conv1: Conv2d(32, 3, 1)  -> weight (3, 32, 1, 1), bias (3,)
    w1 = jax.random.normal(k1, (3, 32, 1, 1), jnp.float32) * 0.1
    b1 = jax.random.normal(k2, (3,), jnp.float32) * 0.1
    # conv2 realized with in_channels=3 (see note above) -> (3, 3, 1, 1)
    w2 = jax.random.normal(k3, (3, 3, 1, 1), jnp.float32) * 0.1
    b2 = jax.random.normal(k4, (3,), jnp.float32) * 0.1
    return {"w1": w1, "b1": b1, "w2": w2, "b2": b2}


if __name__ == "__main__":
    key = jax.random.PRNGKey(0)
    pkey, xkey1, xkey2 = jax.random.split(key, 3)
    params = init_params(pkey)

    fwd = jax.jit(model_forward)

    # primary case consistent with the module (N, Cin=32, H, W)
    x = jax.random.normal(xkey1, (1, 32, 16, 16), jnp.float32)
    out = jax.block_until_ready(fwd(x, params))
    assert out.shape == (1, 3, 20, 20), out.shape
    assert out.dtype == jnp.float32
    ref = jax.block_until_ready(_ref_forward(x, params))
    assert jnp.allclose(out, ref, rtol=1e-4, atol=1e-5), float(
        jnp.max(jnp.abs(out - ref)))

    # batch-aware + ragged-last-block path (M = 144 is not a multiple of 128)
    xb = jax.random.normal(xkey2, (2, 32, 12, 12), jnp.float32)
    outb = jax.block_until_ready(fwd(xb, params))
    assert outb.shape == (2, 3, 16, 16), outb.shape
    refb = jax.block_until_ready(_ref_forward(xb, params))
    assert jnp.allclose(outb, refb, rtol=1e-4, atol=1e-5), float(
        jnp.max(jnp.abs(outb - refb)))

    print("KERNEL_OK")
</pallas_src>

<mosaic_0001>
module attributes {stable_mosaic.version = 11 : i64} {
  func.func @_matmul_bias_kernel(%arg0: i32, %arg1: i32, %arg2: memref<3x32xf32, #tpu.memory_space<vmem>>, %arg3: memref<3x1xf32, #tpu.memory_space<vmem>>, %arg4: memref<1x32x128xf32, #tpu.memory_space<vmem>>, %arg5: memref<1x3x128xf32, #tpu.memory_space<vmem>>) attributes {dimension_semantics = [#tpu.dimension_semantics<parallel>, #tpu.dimension_semantics<parallel>], iteration_bounds = array<i64: 1, 2>, scalar_prefetch = 0 : i64, scratch_operands = 0 : i64, tpu.core_type = #tpu.core_type<tc>, window_params = [{pipeline_mode = #tpu.pipeline_mode<synchronous>, transform_indices = @transform_0, window_bounds = array<i64: 3, 32>}, {pipeline_mode = #tpu.pipeline_mode<synchronous>, transform_indices = @transform_1, window_bounds = array<i64: 3, 1>}, {transform_indices = @transform_2, window_bounds = array<i64: 1, 32, 128>}, {transform_indices = @transform_3, window_bounds = array<i64: 1, 3, 128>}]} {
    %c0 = arith.constant 0 : index
    %c0_0 = arith.constant 0 : index
    %0 = vector.load %arg2[%c0, %c0_0] : memref<3x32xf32, #tpu.memory_space<vmem>>, vector<3x32xf32>
    %c0_1 = arith.constant 0 : index
    %c0_2 = arith.constant 0 : index
    %c0_3 = arith.constant 0 : index
    %1 = vector.load %arg4[%c0_1, %c0_2, %c0_3] : memref<1x32x128xf32, #tpu.memory_space<vmem>>, vector<1x32x128xf32>
    %2 = vector.shape_cast %1 : vector<1x32x128xf32> to vector<32x128xf32>
    %cst = arith.constant dense<0.000000e+00> : vector<3x128xf32>
    %3 = tpu.matmul %0, %2, %cst {dimension_numbers = #tpu.dot_dimension_numbers<[1], [0], [0], [1], [0, 0, 1, 1], [], []>} : vector<3x32xf32>, vector<32x128xf32>, vector<3x128xf32> -> vector<3x128xf32>
    %c0_4 = arith.constant 0 : index
    %c0_5 = arith.constant 0 : index
    %4 = vector.load %arg3[%c0_4, %c0_5] : memref<3x1xf32, #tpu.memory_space<vmem>>, vector<3x1xf32>
    %5 = vector.broadcast %4 : vector<3x1xf32> to vector<3x128xf32>
    %6 = arith.addf %3, %5 : vector<3x128xf32>
    %c0_6 = arith.constant 0 : index
    %c0_7 = arith.constant 0 : index
    %c0_8 = arith.constant 0 : index
    %7 = vector.load %arg5[%c0_6, %c0_7, %c0_8] : memref<1x3x128xf32, #tpu.memory_space<vmem>>, vector<1x3x128xf32>
    %8 = vector.shape_cast %7 : vector<1x3x128xf32> to vector<3x128xf32>
    %9 = vector.shape_cast %6 : vector<3x128xf32> to vector<1x3x128xf32>
    tpu.vector_store %arg5[%c0_6, %c0_7, %c0_8], %9 {strides = array<i32>} : memref<1x3x128xf32, #tpu.memory_space<vmem>>, vector<1x3x128xf32>,
    return
  }
  func.func @transform_0(%arg0: i32, %arg1: i32) -> (i32, i32) {
    %c0_i32 = arith.constant 0 : i32
    %c0_i32_0 = arith.constant 0 : i32
    %c0_i32_1 = arith.constant 0 : i32
    return %c0_i32, %c0_i32_0 : i32, i32
  }
  func.func @transform_1(%arg0: i32, %arg1: i32) -> (i32, i32) {
    %c0_i32 = arith.constant 0 : i32
    %c0_i32_0 = arith.constant 0 : i32
    %c0_i32_1 = arith.constant 0 : i32
    return %c0_i32, %c0_i32_0 : i32, i32
  }
  func.func @transform_2(%arg0: i32, %arg1: i32) -> (i32, i32, i32) {
    %c0_i32 = arith.constant 0 : i32
    %c0_i32_0 = arith.constant 0 : i32
    return %arg0, %c0_i32, %arg1 : i32, i32, i32
  }
  func.func @transform_3(%arg0: i32, %arg1: i32) -> (i32, i32, i32) {
    %c0_i32 = arith.constant 0 : i32
    %c0_i32_0 = arith.constant 0 : i32
    return %arg0, %c0_i32, %arg1 : i32, i32, i32
  }
}

</mosaic_0001>

<llo_original>
// kernel: model_forward.1
$region0: #{model_forward.1}
  #allocation0 [shape = 'u32[]', space=smem, size = 0x4, offset = 0x4, fixed_abs, tag = 'smem constant byte address 0x4 - core index']
  #allocation1 [shape = 'u32[144,128]{1,0:T(1,128)}', space=vmem, size = 0x12000, scoped, tag = 'internal scratch']
  %s0 = inlined_call_operand.vmem [shape: f32[3,32], index: 0, kind: input, shape index: {}]
  %s1 = inlined_call_operand.vmem [shape: f32[3,1], index: 1, kind: input, shape index: {}]
  %s2 = inlined_call_operand.vmem [shape: f32[1,32,256], index: 2, kind: input, shape index: {}]
  %s3 = inlined_call_operand.vmem [shape: f32[1,3,256], index: 3, kind: output, shape index: {}]
  %s4 = sld [smem:[#allocation0]]
  $region83: #{model_forward.1} parent=0
    _
  %s6 = ssub.s32 1, %s4
  %s7 = scalar_select 0, %s6, %s4
  $region1: #{model_forward.1} parent=0
    #allocation2 [shape = 'u8[32768]{0}', space=vmem, size = 0x8000, scoped, tag = 'input window, operand 2']
    loop: start=0, step=1, limit=4
    $region2: #{model_forward.1} parent=1 // loop_pre_header
      _
    $region3: #{model_forward.1} parent=1 // loop_header
      %s9 = sphi 0, %s13
      %p10 = scmp.ge.s32.totalorder %s9, 4
      %s16 = sphi 0, %s28
      %s17 = sphi 0, %s24
      %s18 = sphi 0, %s16
      %s19 = sphi 0, %s17
      %s20 = sphi 0, %s18
      %s21 = sphi 0, %s19
      %s29 = sphi 0, %s29
      %s31 = sphi 0, %s29
      %s32 = sphi 0, %s31
      %s46 = sphi 0, %s32
      %s50 = sphi 0, %s50
      %s52 = sphi 0, %s50
      %s53 = sphi 0, %s52
      %s67 = sphi 0, %s53
      %s75 = sphi 0, %s77
      %s78 = sphi 0, %s75
      %s79 = sphi 0, %s78
      %s95 = sphi 0, %s79
      %s103 = sphi 0, %s105
      %s106 = sphi 0, %s103
      %s107 = sphi 0, %s106
      %s123 = sphi 0, %s107
    $region4: #{model_forward.1} parent=1 // loop_header_branch
      %12 = sbr.rel (%p10) target = $region8
    $region5: #{model_forward.1} parent=1 // loop_body
      %s14 = ssub.s32 %s9, 1
      %s15 = ssub.s32 %s9, 2
      %s22 = sadd.s32 1, %s17
      %p23 = scmp.ge.s32.totalorder %s22, 2
      %s24 = scalar_select %p23, 0, %s22
      %s25 = sadd.s32 1, %s16
      %s26 = scalar_select %p23, %s25, %s16
      %p27 = scmp.ge.s32.totalorder %s26, 1
      %s28 = scalar_select %p27, 0, %s26
      %s30 = sadd.s32 %s29, 1
      %p33 = scmp.eq.s32.totalorder %s9, 1
      %p34 = scmp.ne.s32.totalorder %s29, %s31
      %p35 = scmp.eq.s32.totalorder %s9, 0
      %p36 = por %p34, %p35
      %p37 = scmp.ne.s32.totalorder %s29, %s31
      %p38 = scmp.eq.s32.totalorder %s14, 1
      %p39 = por %p37, %p38
      %p40 = scmp.ne.s32.totalorder %s31, %s32
      %p41 = scmp.eq.s32.totalorder %s14, 0
      %p42 = por %p40, %p41
      %p43 = scmp.ne.s32.totalorder %s31, %s32
      %p44 = scmp.eq.s32.totalorder %s15, 1
      %p45 = por %p43, %p44
      %p47 = scmp.ne.s32.totalorder %s32, %s46
      %p48 = scmp.eq.s32.totalorder %s15, 0
      %p49 = por %p47, %p48
      %s51 = sadd.s32 %s50, 1
      %p54 = scmp.eq.s32.totalorder %s9, 1
      %p55 = scmp.ne.s32.totalorder %s50, %s52
      %p56 = scmp.eq.s32.totalorder %s9, 0
      %p57 = por %p55, %p56
      %p58 = scmp.ne.s32.totalorder %s50, %s52
      %p59 = scmp.eq.s32.totalorder %s14, 1
      %p60 = por %p58, %p59
      %p61 = scmp.ne.s32.totalorder %s52, %s53
      %p62 = scmp.eq.s32.totalorder %s14, 0
      %p63 = por %p61, %p62
      %p64 = scmp.ne.s32.totalorder %s52, %s53
      %p65 = scmp.eq.s32.totalorder %s15, 1
      %p66 = por %p64, %p65
      %p68 = scmp.ne.s32.totalorder %s53, %s67
      %p69 = scmp.eq.s32.totalorder %s15, 0
      %p70 = por %p68, %p69
      %s71 = ssub.s32 %s16, %s28
      %s72 = ssub.s32 %s17, %s24
      %s73 = sor.u32 %s71, %s72
      %p74 = scmp.eq.s32.totalorder %s73, 0
      %s76 = sadd.s32 %s75, 1
      %s77 = scalar_select %p74, %s75, %s76
      %p80 = pneg %p74
      %p81 = scmp.eq.s32.totalorder %s9, 1
      %p82 = por %p80, %p81
      %p83 = scmp.ne.s32.totalorder %s75, %s78
      %p84 = scmp.eq.s32.totalorder %s9, 0
      %p85 = por %p83, %p84
      %p86 = scmp.ne.s32.totalorder %s75, %s78
      %p87 = scmp.eq.s32.totalorder %s14, 1
      %p88 = por %p86, %p87
      %p89 = scmp.ne.s32.totalorder %s78, %s79
      %p90 = scmp.eq.s32.totalorder %s14, 0
      %p91 = por %p89, %p90
      %p92 = scmp.ne.s32.totalorder %s78, %s79
      %p93 = scmp.eq.s32.totalorder %s15, 1
      %p94 = por %p92, %p93
      %p96 = scmp.ne.s32.totalorder %s79, %s95
      %p97 = scmp.eq.s32.totalorder %s15, 0
      %p98 = por %p96, %p97
      %s99 = ssub.s32 %s16, %s28
      %s100 = ssub.s32 %s17, %s24
      %s101 = sor.u32 %s99, %s100
      %p102 = scmp.eq.s32.totalorder %s101, 0
      %s104 = sadd.s32 %s103, 1
      %s105 = scalar_select %p102, %s103, %s104
      %p108 = pneg %p102
      %p109 = scmp.eq.s32.totalorder %s9, 1
      %p110 = por %p108, %p109
      %p111 = scmp.ne.s32.totalorder %s103, %s106
      %p112 = scmp.eq.s32.totalorder %s9, 0
      %p113 = por %p111, %p112
      %p114 = scmp.ne.s32.totalorder %s103, %s106
      %p115 = scmp.eq.s32.totalorder %s14, 1
      %p116 = por %p114, %p115
      %p117 = scmp.ne.s32.totalorder %s106, %s107
      %p118 = scmp.eq.s32.totalorder %s14, 0
      %p119 = por %p117, %p118
      %p120 = scmp.ne.s32.totalorder %s106, %s107
      %p121 = scmp.eq.s32.totalorder %s15, 1
      %p122 = por %p120, %p121
      %p124 = scmp.ne.s32.totalorder %s107, %s123
      %p125 = scmp.eq.s32.totalorder %s15, 0
      %p126 = por %p124, %p125
      %p127 = scmp.le.s32.totalorder 1, %s9
      %p128 = scmp.lt.s32.totalorder %s9, 3
      %p129 = pnand %p127, %p128
      %p130 = pneg %p129
      // Predicated region
      $region9: #{model_forward.1} parent=5 // pred_check
        _
      $region10: #{model_forward.1} parent=5 // pred_check_branch
        %132 = sbr.rel (%p129) target = $region12
      $region11: #{model_forward.1} parent=5 // pred_region
        %s133 = ssub.s32 %s9, 1
        // Predicated region
        $region13: #{model_forward.1} parent=11 // pred_check
          %p134 = pneg %p42
        $region14: #{model_forward.1} parent=11 // pred_check_branch
          %136 = sbr.rel (%p134) target = $region16
        $region15: #{model_forward.1} parent=11 // pred_region
          _
        $region16: #{model_forward.1} parent=11 // pred_fallthru
          _
        // Predicated region
        $region17: #{model_forward.1} parent=11 // pred_check
          %p137 = pneg %p63
        $region18: #{model_forward.1} parent=11 // pred_check_branch
          %139 = sbr.rel (%p137) target = $region20
        $region19: #{model_forward.1} parent=11 // pred_region
          _
        $region20: #{model_forward.1} parent=11 // pred_fallthru
          _
      $region12: #{model_forward.1} parent=5 // pred_fallthru
        _
      %p140 = scmp.lt.s32.totalorder %s9, 2
      // Predicated region
      $region21: #{model_forward.1} parent=5 // pred_check
        %p141 = pneg %p140
      $region22: #{model_forward.1} parent=5 // pred_check_branch
        %143 = sbr.rel (%p141) target = $region24
      $region23: #{model_forward.1} parent=5 // pred_region
        // Predicated region
        $region25: #{model_forward.1} parent=23 // pred_check
          %p144 = pneg %p85
        $region26: #{model_forward.1} parent=23 // pred_check_branch
          %146 = sbr.rel (%p144) target = $region28
        $region27: #{model_forward.1} parent=23 // pred_region
          %s147 = sand.u32 %s75, 1
          %s148 = sand.u32 %s75, 1
          %s149 = smul.addr %s148, 32
          %s150 = scalar_lea.vmem [#allocation2], %s149
          %s151 = smul.addr %s16, 8
          %s152 = sadd.s32 %s17, %s151
          %s153 = smul.addr %s152, 8
          %s154 = scalar_lea.vmem %s2, %s153
          // Predicated region
          $region29: #{model_forward.1} parent=27 // pred_check
            _
          $region30: #{model_forward.1} parent=27 // pred_check_branch
            %156 = sbr.rel (0) target = $region32
          $region31: #{model_forward.1} parent=27 // pred_region
            // Predicated region
            $region33: #{model_forward.1} parent=31 // pred_check
              _
            $region34: #{model_forward.1} parent=31 // pred_check_branch
              %158 = sbr.rel (0) target = $region36
            $region35: #{model_forward.1} parent=31 // pred_region
              // Predicated region
              $region48: #{model_forward.1} parent=35 // pred_check
                _
              $region49: #{model_forward.1} parent=35 // pred_check_branch
                %180 = sbr.rel (0) target = $region51
              $region50: #{model_forward.1} parent=35 // pred_region
                loop: start=0, step=1, limit=1
                $region52: #{model_forward.1} parent=50 // loop_pre_header
                  _
                $region53: #{model_forward.1} parent=50 // loop_header
                  %s182 = sphi 0, %s186
                  %p183 = scmp.ge.s32.totalorder %s182, 1
                  %s187 = sphi %s154, %s154
                  %s188 = sphi %s150, %s150
                $region54: #{model_forward.1} parent=50 // loop_header_branch
                  %185 = sbr.rel (%p183) target = $region58
                $region55: #{model_forward.1} parent=50 // loop_body
                  %v189 = vld [vmem:[%s187] sm:$0xff]
                  %190 = vst [vmem:[%s188] sm:$0xff] %v189
                  %v191 = vld [vmem:[%s187 + $0x10] sm:$0xff]
                  %192 = vst [vmem:[%s188 + $0x8] sm:$0xff] %v191
                  %v193 = vld [vmem:[%s187 + $0x20] sm:$0xff]
                  %194 = vst [vmem:[%s188 + $0x10] sm:$0xff] %v193
                  %v195 = vld [vmem:[%s187 + $0x30] sm:$0xff]
                  %196 = vst [vmem:[%s188 + $0x18] sm:$0xff] %v195
                $region56: #{model_forward.1} parent=50 // loop_footer
                  %s186 = sadd.s32 1, %s182
                $region57: #{model_forward.1} parent=50 // loop_footer_branch
                  %181 = sbr.rel target = $region53
                $region58: #{model_forward.1} parent=50 // loop_exit
                  _
              $region51: #{model_forward.1} parent=35 // pred_fallthru
                _
              // Predicated region
              $region59: #{model_forward.1} parent=35 // pred_check
                _
              $region60: #{model_forward.1} parent=35 // pred_check_branch
                %198 = sbr.rel target = $region62
              $region61: #{model_forward.1} parent=35 // pred_region
                _
              $region62: #{model_forward.1} parent=35 // pred_fallthru
                _
            $region36: #{model_forward.1} parent=31 // pred_fallthru
              _
            // Predicated region
            $region37: #{model_forward.1} parent=31 // pred_check
              _
            $region38: #{model_forward.1} parent=31 // pred_check_branch
              %160 = sbr.rel target = $region40
            $region39: #{model_forward.1} parent=31 // pred_region
              %s162 = ssub.s32 256, 1
              loop: start=0, step=1, limit=1
              $region41: #{model_forward.1} parent=39 // loop_pre_header
                _
              $region42: #{model_forward.1} parent=39 // loop_header
                %s164 = sphi 0, %s168
                %p165 = scmp.ge.s32.totalorder %s164, 1
                %s169 = sphi %s154, %s154
                %s170 = sphi %s150, %s150
              $region43: #{model_forward.1} parent=39 // loop_header_branch
                %167 = sbr.rel (%p165) target = $region47
              $region44: #{model_forward.1} parent=39 // loop_body
                %v171 = vld [vmem:[%s169] sm:%s162]
                %172 = vst [vmem:[%s170] sm:%s162] %v171
                %v173 = vld [vmem:[%s169 + $0x10] sm:%s162]
                %174 = vst [vmem:[%s170 + $0x8] sm:%s162] %v173
                %v175 = vld [vmem:[%s169 + $0x20] sm:%s162]
                %176 = vst [vmem:[%s170 + $0x10] sm:%s162] %v175
                %v177 = vld [vmem:[%s169 + $0x30] sm:%s162]
                %178 = vst [vmem:[%s170 + $0x18] sm:%s162] %v177
              $region45: #{model_forward.1} parent=39 // loop_footer
                %s168 = sadd.s32 1, %s164
              $region46: #{model_forward.1} parent=39 // loop_footer_branch
                %163 = sbr.rel target = $region42
              $region47: #{model_forward.1} parent=39 // loop_exit
                _
            $region40: #{model_forward.1} parent=31 // pred_fallthru
              _
          $region32: #{model_forward.1} parent=27 // pred_fallthru
            _
          %199 = vnop
        $region28: #{model_forward.1} parent=23 // pred_fallthru
          _
      $region24: #{model_forward.1} parent=5 // pred_fallthru
        _
      %p200 = scmp.le.s32.totalorder 1, %s9
      %p201 = scmp.lt.s32.totalorder %s9, 3
      %p202 = pnand %p200, %p201
      %p203 = pneg %p202
      // Predicated region
      $region63: #{model_forward.1} parent=5 // pred_check
        _
      $region64: #{model_forward.1} parent=5 // pred_check_branch
        %205 = sbr.rel (%p202) target = $region66
      $region65: #{model_forward.1} parent=5 // pred_region
        %s206 = ssub.s32 %s9, 1
        %s207 = sand.u32 %s78, 1
        %s208 = sand.u32 %s78, 1
        %s209 = smul.addr %s208, 32
        %s210 = scalar_lea.vmem [#allocation2], %s209
        // Predicated region
        $region67: #{model_forward.1} parent=65 // pred_check
          %p211 = pneg %p91
        $region68: #{model_forward.1} parent=65 // pred_check_branch
          %213 = sbr.rel (%p211) target = $region70
        $region69: #{model_forward.1} parent=65 // pred_region
          _
        $region70: #{model_forward.1} parent=65 // pred_fallthru
          _
        %p214 = pneg %p42
        %p215 = pneg %p39
        %p216 = pneg %p63
        %p217 = pneg %p60
        %s218 = sand.u32 %s78, 1
        %s219 = sand.u32 %s78, 1
        %s220 = smul.addr %s219, 32
        %s221 = scalar_lea.vmem [#allocation2], %s220
        %p222 = pneg %p91
        %p223 = pneg %p88
        %p224 = pneg %p119
        %p225 = pneg %p116
        %p226 = scmp.lt.s32.totalorder %s18, 0
        %s227 = scalar_select %p226, %s18, 0
        %p228 = scmp.lt.s32.totalorder %s19, 1
        %s229 = scalar_select %p228, %s19, 1
        %s230 = smul.addr %s227, 2
        %s231 = sadd.s32 %s229, %s230
        %s232 = smul.addr %s231, 4
        %s233 = scalar_lea.vmem %s3, %s232
        %p234 = scmp.lt.s32.totalorder %s18, 0
        %s235 = scalar_select %p234, %s18, 0
        %p236 = scmp.lt.s32.totalorder %s19, 1
        %s237 = scalar_select %p236, %s19, 1
        %s238 = smul.addr %s235, 2
        %s239 = sadd.s32 %s237, %s238
        %s240 = smul.addr %s239, 4
        %s241 = scalar_lea.vmem %s3, %s240
        %v242 = vld [vmem:[%s0] sm:$0x7]
        %v243 = vld [vmem:[%s210] sm:$0xff]
        %v244 = vld [vmem:[%s210 + $0x8] sm:$0xff]
        %v245 = vld [vmem:[%s210 + $0x10] sm:$0xff]
        %v246 = vld [vmem:[%s210 + $0x18] sm:$0xff]
        %v247 = vld [vmem:[%s1] sm:$0x7]
        %249 = vset.pattern.permute.xlu0 0
        %250 = vperm.xlu0 %249, %v247
        %v251 = vpop.permute.xlu0 %250
        %vm253 = vcmask 261120
        %v255 = vsel %vm253, %v242, 0
        %257 = vmatprep.subr.mxu0 0.0
        %258 = vmatpush1.msra.mxu0 0.0
        %259 = vmatprep.subr.mxu0 0.0
        %260 = vmatpush1.msra.mxu0 0.0
        %261 = vmatprep.subr.mxu0 0.0
        %262 = vmatpush1.msra.mxu0 0.0
        %263 = vmatprep.subr.mxu0 0.0
        %264 = vmatpush1.msra.mxu0 0.0
        %265 = vmatprep.subr.mxu0 0.0
        %266 = vmatpush1.msra.mxu0 0.0
        %267 = vmatprep.subr.mxu0 0.0
        %268 = vmatpush1.msra.mxu0 0.0
        %269 = vmatprep.subr.mxu0 0.0
        %270 = vmatpush1.msra.mxu0 0.0
        %271 = vmatprep.subr.mxu0 0.0
        %272 = vmatpush1.msra.mxu0 0.0
        %273 = vmatprep.subr.mxu0 0.0
        %274 = vmatpush1.msra.mxu0 0.0
        %275 = vmatprep.subr.mxu0 0.0
        %276 = vmatpush1.msra.mxu0 0.0
        %277 = vmatprep.subr.mxu0 0.0
        %278 = vmatpush1.msra.mxu0 0.0
        %279 = vmatprep.subr.mxu0 0.0
        %280 = vmatpush1.msra.mxu0 0.0
        %281 = vmatprep.subr.mxu0 0.0
        %282 = vmatpush1.msra.mxu0 %v246
        %283 = vmatprep.subr.mxu0 0.0
        %284 = vmatpush1.msra.mxu0 %v245
        %285 = vmatprep.subr.mxu0 0.0
        %286 = vmatpush1.msra.mxu0 %v244
        %287 = vmatprep.subr.mxu0 0.0
        %288 = vmatpush1.msra.mxu0 %v243
        %289 = vmatprep.subr.mxu0 0.0
        %290 = vmatpush2.msra.mxu0 0.0
        %291 = vmatprep.subr.mxu0 0.0
        %292 = vmatpush2.msra.mxu0 0.0
        %293 = vmatprep.subr.mxu0 0.0
        %294 = vmatpush2.msra.mxu0 0.0
        %295 = vmatprep.subr.mxu0 0.0
        %296 = vmatpush2.msra.mxu0 0.0
        %297 = vmatprep.subr.mxu0 0.0
        %298 = vmatpush2.msra.mxu0 0.0
        %299 = vmatprep.subr.mxu0 0.0
        %300 = vmatpush2.msra.mxu0 0.0
        %301 = vmatprep.subr.mxu0 0.0
        %302 = vmatpush2.msra.mxu0 0.0
        %303 = vmatprep.subr.mxu0 0.0
        %304 = vmatpush2.msra.mxu0 0.0
        %305 = vmatprep.subr.mxu0 0.0
        %306 = vmatpush2.msra.mxu0 0.0
        %307 = vmatprep.subr.mxu0 0.0
        %308 = vmatpush2.msra.mxu0 0.0
        %309 = vmatprep.subr.mxu0 0.0
        %310 = vmatpush2.msra.mxu0 0.0
        %311 = vmatprep.subr.mxu0 0.0
        %312 = vmatpush2.msra.mxu0 0.0
        %313 = vmatprep.subr.mxu0 0.0
        %314 = vmatpush2.msra.mxu0 0.0
        %315 = vmatprep.subr.mxu0 0.0
        %316 = vmatpush2.msra.mxu0 0.0
        %317 = vmatprep.subr.mxu0 0.0
        %318 = vmatpush2.msra.mxu0 0.0
        %319 = vmatprep.subr.mxu0 0.0
        %320 = vmatpush2.msra.mxu0 0.0
        %321 = vmatprep.mubr.f32.mxu0 0.0
        %322 = vmatmul.mubr.f32.gmra.mxu0 %v255
        %v323 = vpop.f32.mrf.mxu0
        %v324 = vadd.f32 %v251, %v323
        %v325 = vpop.f32.mrf.mxu0
        %326 = vdwg.mxu0
        %327 = vst [vmem:[%s241] sm:$0x7] %v324
        %p328 = scmp.lt.s32.totalorder %s18, 0
        %s329 = scalar_select %p328, %s18, 0
        %p330 = scmp.lt.s32.totalorder %s19, 1
        %s331 = scalar_select %p330, %s19, 1
        %s332 = smul.addr %s329, 2
        %s333 = sadd.s32 %s331, %s332
        %s334 = smul.addr %s333, 4
        %s335 = scalar_lea.vmem %s3, %s334
        // Predicated region
        $region71: #{model_forward.1} parent=65 // pred_check
          %p336 = pneg %p116
        $region72: #{model_forward.1} parent=65 // pred_check_branch
          %338 = sbr.rel (%p336) target = $region74
        $region73: #{model_forward.1} parent=65 // pred_region
          _
        $region74: #{model_forward.1} parent=65 // pred_fallthru
          _
      $region66: #{model_forward.1} parent=5 // pred_fallthru
        _
      %p339 = scmp.le.s32.totalorder 2, %s9
      // Predicated region
      $region75: #{model_forward.1} parent=5 // pred_check
        %p340 = pneg %p339
      $region76: #{model_forward.1} parent=5 // pred_check_branch
        %342 = sbr.rel (%p340) target = $region78
      $region77: #{model_forward.1} parent=5 // pred_region
        %s343 = ssub.s32 %s9, 2
        // Predicated region
        $region79: #{model_forward.1} parent=77 // pred_check
          %p344 = pneg %p122
        $region80: #{model_forward.1} parent=77 // pred_check_branch
          %346 = sbr.rel (%p344) target = $region82
        $region81: #{model_forward.1} parent=77 // pred_region
          %p347 = scmp.lt.s32.totalorder %s20, 0
          %s348 = scalar_select %p347, %s20, 0
          %p349 = scmp.lt.s32.totalorder %s21, 1
          %s350 = scalar_select %p349, %s21, 1
          %s351 = smul.addr %s348, 2
          %s352 = sadd.s32 %s350, %s351
          %s353 = smul.addr %s352, 4
          %s354 = scalar_lea.vmem %s3, %s353
        $region82: #{model_forward.1} parent=77 // pred_fallthru
          _
      $region78: #{model_forward.1} parent=5 // pred_fallthru
        _
    $region6: #{model_forward.1} parent=1 // loop_footer
      %s13 = sadd.s32 1, %s9
    $region7: #{model_forward.1} parent=1 // loop_footer_branch
      %8 = sbr.rel target = $region3
    $region8: #{model_forward.1} parent=1 // loop_exit
      _

</llo_original>
